<compile_context>
chip_gen: v6e
topology: v6e:2x2x1
jax: 0.10.0
libtpu: 0.0.40
codegen_flags: <defaults>
</compile_context>

<pallas_src>
import jax
import jax.numpy as jnp
from jax.experimental import pallas as pl
from jax.experimental.pallas import tpu as pltpu

LANE = 128


def _round_up(x: int, m: int) -> int:
    return ((x + m - 1) // m) * m


def _cdiv(a: int, b: int) -> int:
    return -(-a // b)


def mlp_kernel(x_ref, w1_ref, b1_ref, w2_ref, b2_ref, o_ref, acc_ref):
    """One (batch-tile, hidden-tile) step of  out = relu(x @ W1 + b1) @ W2 + b2."""
    h_idx = pl.program_id(1)

    @pl.when(h_idx == 0)
    def _():
        acc_ref[...] = jnp.zeros_like(acc_ref)

    # fc1 on this hidden tile: cast x to the MXU dtype in-kernel.
    h = jnp.dot(x_ref[...].astype(w1_ref.dtype), w1_ref[...],
                preferred_element_type=jnp.float32)
    # Bias add + ReLU in f32 on the VPU.
    h = jnp.maximum(h + b1_ref[...].astype(jnp.float32), 0.0)
    # fc2 partial product for this hidden tile, accumulated in f32.
    acc_ref[...] += jnp.dot(h.astype(w2_ref.dtype), w2_ref[...],
                            preferred_element_type=jnp.float32)

    @pl.when(h_idx == pl.num_programs(1) - 1)
    def _():
        o_ref[...] = (acc_ref[...] + b2_ref[...].astype(jnp.float32)
                      ).astype(o_ref.dtype)


def prepare_classifier_params(w1, b1, w2, b2, *, mxu_dtype=jnp.bfloat16):
    """One-time (init-time) weight preparation — NOT in the per-forward path.

    Accepts PyTorch-layout weights: w1 (hidden, in), w2 (out, hidden).
    Returns (w1_p, b1_p, w2_p, b2_p) with w* transposed to (in, out) layout,
    the hidden dim zero-padded to a multiple of 128 (exact: padded units have
    zero weight and zero bias), matmul operands cast to `mxu_dtype`, biases f32.
    Use mxu_dtype=jnp.float32 for a full-f32 (torch-bit-comparable-ish) path.
    """
    H, K = w1.shape
    N, H2 = w2.shape
    assert H == H2 and b1.shape[-1] == H and b2.shape[-1] == N
    H_p = _round_up(H, LANE)
    w1_p = jnp.zeros((K, H_p), mxu_dtype).at[:, :H].set(w1.T.astype(mxu_dtype))
    b1_p = jnp.zeros((1, H_p), jnp.float32).at[:, :H].set(
        b1.reshape(1, H).astype(jnp.float32))
    w2_p = jnp.zeros((H_p, N), mxu_dtype).at[:H, :].set(w2.T.astype(mxu_dtype))
    b2_p = b2.reshape(1, N).astype(jnp.float32)
    return w1_p, b1_p, w2_p, b2_p


def _vmem_budget_bytes() -> int:
    try:
        cap = int(pltpu.get_tpu_info().vmem_capacity_bytes)
    except Exception:
        cap = 64 << 20  # conservative fallback (v7x per-TC size)
    # Leave ~25% headroom for Mosaic internal scratch; never request > 100 MiB.
    return min(cap * 3 // 4, 100 << 20)


def classifier_forward(x, w1, b1, w2, b2):
    """x: (..., K); (w1, b1, w2, b2) from prepare_classifier_params."""
    orig_shape = x.shape
    K = orig_shape[-1]
    if x.ndim != 2:
        x = x.reshape(-1, K)
    B = x.shape[0]
    K_w, H_p = w1.shape
    N = w2.shape[1]
    assert K == K_w, "x feature dim does not match prepared w1"

    w_itemsize = jnp.dtype(w1.dtype).itemsize
    x_itemsize = jnp.dtype(x.dtype).itemsize
    budget = _vmem_budget_bytes()

    # ---- hidden tile: largest 128-multiple divisor of H_p whose
    #      (double-buffered) weight tiles fit in half the VMEM budget.
    def weight_bytes(bh: int) -> int:
        return 2 * w_itemsize * (K * bh + bh * N) + 2 * 4 * (bh + N)

    units = H_p // LANE
    block_h = LANE
    for d in range(units, 0, -1):
        if units % d == 0 and weight_bytes(LANE * d) <= budget // 2:
            block_h = LANE * d
            break
    grid_h = H_p // block_h

    # ---- batch tile: fill the remaining budget, cap at 1024 rows, keep >= 2
    #      tiles when B >= 256 so both v7x TensorCores get work.
    act_per_row = (2 * K * x_itemsize                 # double-buffered x tile
                   + 2 * N * x_itemsize               # double-buffered out tile
                   + block_h * (4 + w_itemsize)       # f32 + casted hidden row
                   + N * 8)                           # f32 accumulator + result
    act_budget = max(budget - weight_bytes(block_h), act_per_row * LANE)
    max_bm = min(1024, max(LANE, (act_budget // act_per_row) // LANE * LANE))

    if B < 2 * LANE:
        block_m = B                                   # one block == full batch
    else:
        block_m = min(max_bm, _round_up(B, LANE))
        while _cdiv(B, block_m) < 2 and block_m > LANE:
            block_m //= 2
        block_m = max(LANE, block_m // LANE * LANE)
    grid_m = _cdiv(B, block_m)

    vmem_needed = weight_bytes(block_h) + act_per_row * block_m
    vmem_limit = int(min(budget,
                         max(vmem_needed + vmem_needed // 4 + (2 << 20),
                             32 << 20)))

    weight_passes = 1 if grid_h == 1 else grid_m
    cost = pl.CostEstimate(
        flops=int(2 * B * (K * H_p + H_p * N)),
        transcendentals=0,
        bytes_accessed=int(B * K * x_itemsize + B * N * x_itemsize
                           + weight_passes * w_itemsize * (K * H_p + H_p * N)
                           + 4 * (H_p + N)),
    )

    out = pl.pallas_call(
        mlp_kernel,
        out_shape=jax.ShapeDtypeStruct((B, N), x.dtype),
        grid_spec=pltpu.PrefetchScalarGridSpec(
            num_scalar_prefetch=0,
            grid=(grid_m, grid_h),
            in_specs=[
                pl.BlockSpec((block_m, K), lambda i, h: (i, 0)),    # x
                pl.BlockSpec((K, block_h), lambda i, h: (0, h)),    # w1
                pl.BlockSpec((1, block_h), lambda i, h: (0, h)),    # b1
                pl.BlockSpec((block_h, N), lambda i, h: (h, 0)),    # w2
                pl.BlockSpec((1, N), lambda i, h: (0, 0)),          # b2
            ],
            out_specs=pl.BlockSpec((block_m, N), lambda i, h: (i, 0)),
            scratch_shapes=[pltpu.VMEM((block_m, N), jnp.float32)],
        ),
        compiler_params=pltpu.CompilerParams(
            dimension_semantics=("parallel", "arbitrary"),
            vmem_limit_bytes=vmem_limit,
        ),
        cost_estimate=cost,
    )(x, w1, b1, w2, b2)

    if len(orig_shape) != 2:
        out = out.reshape(*orig_shape[:-1], N)
    return out


if __name__ == "__main__":
    # Small shapes consistent with Classifier(input_dim, hidden_dim, output_dim)
    batch, input_dim, hidden_dim, output_dim = 8, 32, 64, 16

    key = jax.random.PRNGKey(0)
    kx, kw1, kb1, kw2, kb2 = jax.random.split(key, 5)

    x = jax.random.normal(kx, (batch, input_dim), dtype=jnp.float32)

    # PyTorch-layout weights with PyTorch-style uniform init (bound 1/sqrt(fan_in)).
    bound1 = 1.0 / (input_dim ** 0.5)
    w1_t = jax.random.uniform(kw1, (hidden_dim, input_dim), jnp.float32,
                              -bound1, bound1)
    b1 = jax.random.uniform(kb1, (hidden_dim,), jnp.float32, -bound1, bound1)
    bound2 = 1.0 / (hidden_dim ** 0.5)
    w2_t = jax.random.uniform(kw2, (output_dim, hidden_dim), jnp.float32,
                              -bound2, bound2)
    b2 = jax.random.uniform(kb2, (output_dim,), jnp.float32, -bound2, bound2)

    # Init-time weight prep (once), then the forward pass.
    params = prepare_classifier_params(w1_t, b1, w2_t, b2)
    out = jax.block_until_ready(classifier_forward(x, *params))

    assert out.shape == (batch, output_dim)

    # Loose check vs. full-f32 reference (kernel uses bf16 matmul operands).
    ref_f32 = jnp.maximum(x @ w1_t.T + b1, 0.0) @ w2_t.T + b2
    assert jnp.allclose(out, ref_f32, atol=5e-2, rtol=5e-2), \
        "mismatch vs f32 reference"

    # Tight check vs. a reference using the same bf16-cast operands / f32 accum.
    xb = x.astype(jnp.bfloat16).astype(jnp.float32)
    w1b = w1_t.T.astype(jnp.bfloat16).astype(jnp.float32)
    w2b = w2_t.T.astype(jnp.bfloat16).astype(jnp.float32)
    hb = jnp.maximum(xb @ w1b + b1, 0.0).astype(jnp.bfloat16).astype(jnp.float32)
    ref_bf16 = hb @ w2b + b2
    assert jnp.allclose(out, ref_bf16, atol=1e-3, rtol=1e-3), \
        "mismatch vs bf16-consistent reference"

    print("KERNEL_OK")
</pallas_src>

<mosaic_0001>
module attributes {stable_mosaic.version = 11 : i64} {
  func.func @mlp_kernel(%arg0: i32, %arg1: i32, %arg2: memref<8x32xf32, #tpu.memory_space<vmem>>, %arg3: memref<32x128xbf16, #tpu.memory_space<vmem>>, %arg4: memref<1x128xf32, #tpu.memory_space<vmem>>, %arg5: memref<128x16xbf16, #tpu.memory_space<vmem>>, %arg6: memref<1x16xf32, #tpu.memory_space<vmem>>, %arg7: memref<8x16xf32, #tpu.memory_space<vmem>>, %arg8: memref<8x16xf32, #tpu.memory_space<vmem>>) attributes {dimension_semantics = [#tpu.dimension_semantics<parallel>, #tpu.dimension_semantics<arbitrary>], iteration_bounds = array<i64: 1, 1>, scalar_prefetch = 0 : i64, scratch_operands = 1 : i64, tpu.core_type = #tpu.core_type<tc>, window_params = [{transform_indices = @transform_0, window_bounds = array<i64: 8, 32>}, {transform_indices = @transform_1, window_bounds = array<i64: 32, 128>}, {transform_indices = @transform_2, window_bounds = array<i64: 1, 128>}, {transform_indices = @transform_3, window_bounds = array<i64: 128, 16>}, {pipeline_mode = #tpu.pipeline_mode<synchronous>, transform_indices = @transform_4, window_bounds = array<i64: 1, 16>}, {transform_indices = @transform_5, window_bounds = array<i64: 8, 16>}]} {
    %c0_i32 = arith.constant 0 : i32
    %0 = arith.cmpi eq, %arg1, %c0_i32 : i32
    %1 = arith.extui %0 : i1 to i32
    %c0_i32_0 = arith.constant 0 : i32
    %2 = arith.cmpi ne, %1, %c0_i32_0 : i32
    scf.if %2 {
      %cst_16 = arith.constant 0.000000e+00 : f32
      %21 = vector.broadcast %cst_16 : f32 to vector<8x16xf32>
      %c0_17 = arith.constant 0 : index
      %c0_18 = arith.constant 0 : index
      %22 = vector.load %arg8[%c0_17, %c0_18] : memref<8x16xf32, #tpu.memory_space<vmem>>, vector<8x16xf32>
      tpu.vector_store %arg8[%c0_17, %c0_18], %21 {strides = array<i32>} : memref<8x16xf32, #tpu.memory_space<vmem>>, vector<8x16xf32>,
    } else {
    }
    %c0 = arith.constant 0 : index
    %c0_1 = arith.constant 0 : index
    %3 = vector.load %arg2[%c0, %c0_1] : memref<8x32xf32, #tpu.memory_space<vmem>>, vector<8x32xf32>
    %4 = arith.truncf %3 : vector<8x32xf32> to vector<8x32xbf16>
    %c0_2 = arith.constant 0 : index
    %c0_3 = arith.constant 0 : index
    %5 = vector.load %arg3[%c0_2, %c0_3] : memref<32x128xbf16, #tpu.memory_space<vmem>>, vector<32x128xbf16>
    %cst = arith.constant dense<0.000000e+00> : vector<8x128xf32>
    %6 = tpu.matmul %4, %5, %cst {dimension_numbers = #tpu.dot_dimension_numbers<[1], [0], [0], [1], [0, 0, 1, 1], [], []>} : vector<8x32xbf16>, vector<32x128xbf16>, vector<8x128xf32> -> vector<8x128xf32>
    %c0_4 = arith.constant 0 : index
    %c0_5 = arith.constant 0 : index
    %7 = vector.load %arg4[%c0_4, %c0_5] : memref<1x128xf32, #tpu.memory_space<vmem>>, vector<1x128xf32>
    %8 = vector.broadcast %7 : vector<1x128xf32> to vector<8x128xf32>
    %9 = arith.addf %6, %8 : vector<8x128xf32>
    %cst_6 = arith.constant 0.000000e+00 : f32
    %10 = vector.broadcast %cst_6 : f32 to vector<8x128xf32>
    %11 = arith.maximumf %9, %10 : vector<8x128xf32>
    %c0_7 = arith.constant 0 : index
    %c0_8 = arith.constant 0 : index
    %12 = vector.load %arg8[%c0_7, %c0_8] : memref<8x16xf32, #tpu.memory_space<vmem>>, vector<8x16xf32>
    %13 = arith.truncf %11 : vector<8x128xf32> to vector<8x128xbf16>
    %c0_9 = arith.constant 0 : index
    %c0_10 = arith.constant 0 : index
    %14 = vector.load %arg5[%c0_9, %c0_10] : memref<128x16xbf16, #tpu.memory_space<vmem>>, vector<128x16xbf16>
    %cst_11 = arith.constant dense<0.000000e+00> : vector<8x16xf32>
    %15 = tpu.matmul %13, %14, %cst_11 {dimension_numbers = #tpu.dot_dimension_numbers<[1], [0], [0], [1], [0, 0, 1, 1], [], []>} : vector<8x128xbf16>, vector<128x16xbf16>, vector<8x16xf32> -> vector<8x16xf32>
    %16 = arith.addf %12, %15 : vector<8x16xf32>
    %c0_12 = arith.constant 0 : index
    %c0_13 = arith.constant 0 : index
    %17 = vector.load %arg8[%c0_12, %c0_13] : memref<8x16xf32, #tpu.memory_space<vmem>>, vector<8x16xf32>
    tpu.vector_store %arg8[%c0_12, %c0_13], %16 {strides = array<i32>} : memref<8x16xf32, #tpu.memory_space<vmem>>, vector<8x16xf32>,
    %c0_i32_14 = arith.constant 0 : i32
    %18 = arith.cmpi eq, %arg1, %c0_i32_14 : i32
    %19 = arith.extui %18 : i1 to i32
    %c0_i32_15 = arith.constant 0 : i32
    %20 = arith.cmpi ne, %19, %c0_i32_15 : i32
    scf.if %20 {
      %c0_16 = arith.constant 0 : index
      %c0_17 = arith.constant 0 : index
      %21 = vector.load %arg8[%c0_16, %c0_17] : memref<8x16xf32, #tpu.memory_space<vmem>>, vector<8x16xf32>
      %c0_18 = arith.constant 0 : index
      %c0_19 = arith.constant 0 : index
      %22 = vector.load %arg6[%c0_18, %c0_19] : memref<1x16xf32, #tpu.memory_space<vmem>>, vector<1x16xf32>
      %23 = vector.broadcast %22 : vector<1x16xf32> to vector<8x16xf32>
      %24 = arith.addf %21, %23 : vector<8x16xf32>
      %c0_20 = arith.constant 0 : index
      %c0_21 = arith.constant 0 : index
      %25 = vector.load %arg7[%c0_20, %c0_21] : memref<8x16xf32, #tpu.memory_space<vmem>>, vector<8x16xf32>
      tpu.vector_store %arg7[%c0_20, %c0_21], %24 {strides = array<i32>} : memref<8x16xf32, #tpu.memory_space<vmem>>, vector<8x16xf32>,
    } else {
    }
    return
  }
  func.func @transform_0(%arg0: i32, %arg1: i32) -> (i32, i32) {
    %c0_i32 = arith.constant 0 : i32
    %c0_i32_0 = arith.constant 0 : i32
    return %arg0, %c0_i32 : i32, i32
  }
  func.func @transform_1(%arg0: i32, %arg1: i32) -> (i32, i32) {
    %c0_i32 = arith.constant 0 : i32
    %c0_i32_0 = arith.constant 0 : i32
    return %c0_i32, %arg1 : i32, i32
  }
  func.func @transform_2(%arg0: i32, %arg1: i32) -> (i32, i32) {
    %c0_i32 = arith.constant 0 : i32
    %c0_i32_0 = arith.constant 0 : i32
    return %c0_i32, %arg1 : i32, i32
  }
  func.func @transform_3(%arg0: i32, %arg1: i32) -> (i32, i32) {
    %c0_i32 = arith.constant 0 : i32
    %c0_i32_0 = arith.constant 0 : i32
    return %arg1, %c0_i32 : i32, i32
  }
  func.func @transform_4(%arg0: i32, %arg1: i32) -> (i32, i32) {
    %c0_i32 = arith.constant 0 : i32
    %c0_i32_0 = arith.constant 0 : i32
    %c0_i32_1 = arith.constant 0 : i32
    return %c0_i32, %c0_i32_0 : i32, i32
  }
  func.func @transform_5(%arg0: i32, %arg1: i32) -> (i32, i32) {
    %c0_i32 = arith.constant 0 : i32
    %c0_i32_0 = arith.constant 0 : i32
    return %arg0, %c0_i32 : i32, i32
  }
}

</mosaic_0001>

<llo_original>
// kernel: tpu_custom_call.1
$region0: #{tpu_custom_call.1}
  #allocation0 [shape = 'u32[]', space=smem, size = 0x4, offset = 0x4, fixed_abs, tag = 'smem constant byte address 0x4 - core index']
  #allocation1 [shape = 'u32[144,128]{1,0:T(1,128)}', space=vmem, size = 0x12000, scoped, tag = 'internal scratch']
  #allocation2 [shape = 'f32[8,16]{1,0:T(8,128)}', space=vmem, size = 0x1000, scoped, tag = 'scratch operand']
  %s0 = inlined_call_operand.vmem [shape: f32[8,32], index: 0, kind: input, shape index: {}]
  %s1 = inlined_call_operand.vmem [shape: bf16[32,128], index: 1, kind: input, shape index: {}]
  %s2 = inlined_call_operand.vmem [shape: f32[1,128], index: 2, kind: input, shape index: {}]
  %s3 = inlined_call_operand.vmem [shape: bf16[128,16], index: 3, kind: input, shape index: {}]
  %s4 = inlined_call_operand.vmem [shape: f32[1,16], index: 4, kind: input, shape index: {}]
  %s5 = inlined_call_operand.hbm [shape: f32[8,16], index: 5, kind: output, shape index: {}]
  %s6 = sld [smem:[#allocation0]]
  $region38: #{tpu_custom_call.1} parent=0
    _
  %s8 = ssub.s32 1, %s6
  %s9 = scalar_select 0, %s8, %s6
  $region1: #{tpu_custom_call.1} parent=0
    #allocation3 [shape = 'u8[4096]{0}', space=vmem, size = 0x1000, scoped, tag = 'output window, operand 0, single buffered']
    #allocation4 [shape = 's32[1]{0}', space=sflag, size = 0x4, scoped, tag = 'scoped memory for tpu_custom_call.1']
    %10 = vsyncpa [#allocation4], 0
    // Predicated region
    $region2: #{tpu_custom_call.1} parent=1 // pred_check
      _
    $region3: #{tpu_custom_call.1} parent=1 // pred_check_branch
      %12 = sbr.rel (0) target = $region5
    $region4: #{tpu_custom_call.1} parent=1 // pred_region
      _
    $region5: #{tpu_custom_call.1} parent=1 // pred_fallthru
      _
    // Predicated region
    $region6: #{tpu_custom_call.1} parent=1 // pred_check
      _
    $region7: #{tpu_custom_call.1} parent=1 // pred_check_branch
      %14 = sbr.rel (0) target = $region9
    $region8: #{tpu_custom_call.1} parent=1 // pred_region
      _
    $region9: #{tpu_custom_call.1} parent=1 // pred_fallthru
      _
    // Predicated region
    $region10: #{tpu_custom_call.1} parent=1 // pred_check
      _
    $region11: #{tpu_custom_call.1} parent=1 // pred_check_branch
      %16 = sbr.rel (0) target = $region13
    $region12: #{tpu_custom_call.1} parent=1 // pred_region
      _
    $region13: #{tpu_custom_call.1} parent=1 // pred_fallthru
      _
    // Predicated region
    $region14: #{tpu_custom_call.1} parent=1 // pred_check
      _
    $region15: #{tpu_custom_call.1} parent=1 // pred_check_branch
      %18 = sbr.rel (0) target = $region17
    $region16: #{tpu_custom_call.1} parent=1 // pred_region
      _
    $region17: #{tpu_custom_call.1} parent=1 // pred_fallthru
      _
    // Predicated region
    $region18: #{tpu_custom_call.1} parent=1 // pred_check
      _
    $region19: #{tpu_custom_call.1} parent=1 // pred_check_branch
      %20 = sbr.rel (0) target = $region21
    $region20: #{tpu_custom_call.1} parent=1 // pred_region
      _
    $region21: #{tpu_custom_call.1} parent=1 // pred_fallthru
      _
    %p22 = scmp.eq.s32.totalorder 0, 0
    // Predicated region
    $region22: #{tpu_custom_call.1} parent=1 // pred_check
      %p23 = pneg %p22
    $region23: #{tpu_custom_call.1} parent=1 // pred_check_branch
      %25 = sbr.rel (%p23) target = $region25
    $region24: #{tpu_custom_call.1} parent=1 // pred_region
      %vm26 = vcmask 130048
      %27 = vst.msk [vmem:[#allocation2] sm:$0xff] %vm26, 0.0
    $region25: #{tpu_custom_call.1} parent=1 // pred_fallthru
      _
    %v28 = vld [vmem:[%s0] sm:$0xff]
    %v29 = vpack.c.bf16 %v28, %v28
    %v30 = vld [vmem:[%s1] sm:$0xf]
    %v31 = vld [vmem:[%s1 + $0x4] sm:$0xf]
    %v32 = vld [vmem:[%s1 + $0x8] sm:$0xf]
    %v33 = vld [vmem:[%s1 + $0xc] sm:$0xf]
    %v34 = vld [vmem:[%s2] sm:$0x1]
    %v36 = vlaneseq
    %v37 = vshrl.u32 %v36, 7
    %v38 = vsub.s32 0, %v37
    %v39 = vrot.slane %v34, %v38
    %v45 = vunpack.c.l.b16 %v30
    %v46 = vunpack.c.l.b16 %v31
    %v47 = vunpack.c.l.b16 %v32
    %v48 = vunpack.c.l.b16 %v33
    %v49 = vpack.c.b16 %v46, %v45
    %v50 = vpack.c.b16 %v48, %v47
    %vm53 = vcmask 261120
    %v55 = vsel %vm53, %v29, 0
    %57 = vmatprep.subr.bf16.mxu0 0
    %58 = vmatpush1.bf16.msra.mxu0 0
    %59 = vmatprep.subr.bf16.mxu0 0
    %60 = vmatpush1.bf16.msra.mxu0 0
    %61 = vmatprep.subr.bf16.mxu0 0
    %62 = vmatpush1.bf16.msra.mxu0 0
    %63 = vmatprep.subr.bf16.mxu0 0
    %64 = vmatpush1.bf16.msra.mxu0 0
    %65 = vmatprep.subr.bf16.mxu0 0
    %66 = vmatpush1.bf16.msra.mxu0 0
    %67 = vmatprep.subr.bf16.mxu0 0
    %68 = vmatpush1.bf16.msra.mxu0 0
    %69 = vmatprep.subr.bf16.mxu0 0
    %70 = vmatpush1.bf16.msra.mxu0 %v50
    %71 = vmatprep.subr.bf16.mxu0 0
    %72 = vmatpush1.bf16.msra.mxu0 %v49
    %73 = vmatprep.subr.bf16.mxu0 0
    %74 = vmatpush2.bf16.msra.mxu0 0
    %75 = vmatprep.subr.bf16.mxu0 0
    %76 = vmatpush2.bf16.msra.mxu0 0
    %77 = vmatprep.subr.bf16.mxu0 0
    %78 = vmatpush2.bf16.msra.mxu0 0
    %79 = vmatprep.subr.bf16.mxu0 0
    %80 = vmatpush2.bf16.msra.mxu0 0
    %81 = vmatprep.subr.bf16.mxu0 0
    %82 = vmatpush2.bf16.msra.mxu0 0
    %83 = vmatprep.subr.bf16.mxu0 0
    %84 = vmatpush2.bf16.msra.mxu0 0
    %85 = vmatprep.subr.bf16.mxu0 0
    %86 = vmatpush2.bf16.msra.mxu0 0
    %87 = vmatprep.subr.bf16.mxu0 0
    %88 = vmatpush2.bf16.msra.mxu0 0
    %89 = vmatprep.mubr.bf16.mxu0 0
    %90 = vmatmul.mubr.bf16.gmra.mxu0 %v55
    %v91 = vpop.f32.mrf.mxu0
    %v92 = vadd.f32 %v39, %v91
    %v93 = vpop.f32.mrf.mxu0
    %v94 = vpop.f32.mrf.mxu0
    %v95 = vpop.f32.mrf.mxu0
    %96 = vdwg.mxu0
    %v97 = vmax.f32 %v92, 0.0
    %v98 = vld [vmem:[#allocation2] sm:$0xff]
    %v99 = vpack.c.bf16 %v97, %v97
    %v100 = vld [vmem:[%s3] sm:$0xf]
    %v101 = vld [vmem:[%s3 + $0x4] sm:$0xf]
    %v102 = vld [vmem:[%s3 + $0x8] sm:$0xf]
    %v103 = vld [vmem:[%s3 + $0xc] sm:$0xf]
    %v104 = vld [vmem:[%s3 + $0x10] sm:$0xf]
    %v105 = vld [vmem:[%s3 + $0x14] sm:$0xf]
    %v106 = vld [vmem:[%s3 + $0x18] sm:$0xf]
    %v107 = vld [vmem:[%s3 + $0x1c] sm:$0xf]
    %v108 = vld [vmem:[%s3 + $0x20] sm:$0xf]
    %v109 = vld [vmem:[%s3 + $0x24] sm:$0xf]
    %v110 = vld [vmem:[%s3 + $0x28] sm:$0xf]
    %v111 = vld [vmem:[%s3 + $0x2c] sm:$0xf]
    %v112 = vld [vmem:[%s3 + $0x30] sm:$0xf]
    %v113 = vld [vmem:[%s3 + $0x34] sm:$0xf]
    %v114 = vld [vmem:[%s3 + $0x38] sm:$0xf]
    %v115 = vld [vmem:[%s3 + $0x3c] sm:$0xf]
    %v132 = vunpack.c.l.b16 %v100
    %v133 = vunpack.c.l.b16 %v101
    %v134 = vunpack.c.l.b16 %v102
    %v135 = vunpack.c.l.b16 %v103
    %v136 = vunpack.c.l.b16 %v104
    %v137 = vunpack.c.l.b16 %v105
    %v138 = vunpack.c.l.b16 %v106
    %v139 = vunpack.c.l.b16 %v107
    %v140 = vunpack.c.l.b16 %v108
    %v141 = vunpack.c.l.b16 %v109
    %v142 = vunpack.c.l.b16 %v110
    %v143 = vunpack.c.l.b16 %v111
    %v144 = vunpack.c.l.b16 %v112
    %v145 = vunpack.c.l.b16 %v113
    %v146 = vunpack.c.l.b16 %v114
    %v147 = vunpack.c.l.b16 %v115
    %v148 = vpack.c.b16 %v133, %v132
    %v149 = vpack.c.b16 %v135, %v134
    %v150 = vpack.c.b16 %v137, %v136
    %v151 = vpack.c.b16 %v139, %v138
    %v152 = vpack.c.b16 %v141, %v140
    %v153 = vpack.c.b16 %v143, %v142
    %v154 = vpack.c.b16 %v145, %v144
    %v155 = vpack.c.b16 %v147, %v146
    %164 = vmatprep.subr.bf16.mxu0 0
    %165 = vmatpush1.bf16.msra.mxu0 %v155
    %166 = vmatprep.subr.bf16.mxu0 0
    %167 = vmatpush1.bf16.msra.mxu0 %v154
    %168 = vmatprep.subr.bf16.mxu0 0
    %169 = vmatpush1.bf16.msra.mxu0 %v153
    %170 = vmatprep.subr.bf16.mxu0 0
    %171 = vmatpush1.bf16.msra.mxu0 %v152
    %172 = vmatprep.subr.bf16.mxu0 0
    %173 = vmatpush1.bf16.msra.mxu0 %v151
    %174 = vmatprep.subr.bf16.mxu0 0
    %175 = vmatpush1.bf16.msra.mxu0 %v150
    %176 = vmatprep.subr.bf16.mxu0 0
    %177 = vmatpush1.bf16.msra.mxu0 %v149
    %178 = vmatprep.subr.bf16.mxu0 0
    %179 = vmatpush1.bf16.msra.mxu0 %v148
    %180 = vmatprep.subr.bf16.mxu0 0
    %181 = vmatpush2.bf16.msra.mxu0 0
    %182 = vmatprep.subr.bf16.mxu0 0
    %183 = vmatpush2.bf16.msra.mxu0 0
    %184 = vmatprep.subr.bf16.mxu0 0
    %185 = vmatpush2.bf16.msra.mxu0 0
    %186 = vmatprep.subr.bf16.mxu0 0
    %187 = vmatpush2.bf16.msra.mxu0 0
    %188 = vmatprep.subr.bf16.mxu0 0
    %189 = vmatpush2.bf16.msra.mxu0 0
    %190 = vmatprep.subr.bf16.mxu0 0
    %191 = vmatpush2.bf16.msra.mxu0 0
    %192 = vmatprep.subr.bf16.mxu0 0
    %193 = vmatpush2.bf16.msra.mxu0 0
    %194 = vmatprep.subr.bf16.mxu0 0
    %195 = vmatpush2.bf16.msra.mxu0 0
    %196 = vmatprep.mubr.bf16.mxu0 0
    %197 = vmatmul.mubr.bf16.gmra.mxu0 %v99
    %v198 = vpop.f32.mrf.mxu0
    %v199 = vadd.f32 0.0, %v198
    %v200 = vpop.f32.mrf.mxu0
    %v201 = vpop.f32.mrf.mxu0
    %v202 = vpop.f32.mrf.mxu0
    %203 = vdwg.mxu0
    %v204 = vadd.f32 %v98, %v199
    %vm205 = vcmask 130048
    %206 = vst.msk [vmem:[#allocation2] sm:$0xff] %vm205, %v204
    // Predicated region
    $region26: #{tpu_custom_call.1} parent=1 // pred_check
      %p207 = pneg %p22
    $region27: #{tpu_custom_call.1} parent=1 // pred_check_branch
      %209 = sbr.rel (%p207) target = $region29
    $region28: #{tpu_custom_call.1} parent=1 // pred_region
      %v210 = vld [vmem:[#allocation2] sm:$0xff]
      %v211 = vld [vmem:[%s4] sm:$0x1]
      %v213 = vlaneseq
      %v214 = vshrl.u32 %v213, 7
      %v215 = vsub.s32 0, %v214
      %v216 = vrot.slane %v211, %v215
      %v218 = vadd.f32 %v210, %v216
      %219 = vst.msk [vmem:[#allocation3] sm:$0xff] %vm205, %v218
    $region29: #{tpu_custom_call.1} parent=1 // pred_fallthru
      _
    // Predicated region
    $region30: #{tpu_custom_call.1} parent=1 // pred_check
      _
    $region31: #{tpu_custom_call.1} parent=1 // pred_check_branch
      %221 = sbr.rel (0) target = $region33
    $region32: #{tpu_custom_call.1} parent=1 // pred_region
      %s223 = ssub.s32 128, 128
      %224 = vsyncadd [#allocation4], %s223
      %s226 = sshll.u32 [#allocation3], 4
      %s227 = int_to_ptr.vmem [resolvable:$true] %s226
      %229 = dma.vmem_to_hbm [thread:$0]  %s227, 128, %s5, [#allocation4]
    $region33: #{tpu_custom_call.1} parent=1 // pred_fallthru
      _
    // Predicated region
    $region34: #{tpu_custom_call.1} parent=1 // pred_check
      _
    $region35: #{tpu_custom_call.1} parent=1 // pred_check_branch
      %231 = sbr.rel (0) target = $region37
    $region36: #{tpu_custom_call.1} parent=1 // pred_region
      %232 = dma.done [#allocation4], 128
    $region37: #{tpu_custom_call.1} parent=1 // pred_fallthru
      _
    %233 = vsyncpa [#allocation4], 1

</llo_original>
